<compile_context>
chip_gen: v5e
topology: v5e:2x2
jax: 0.10.0
libtpu: 0.0.40
codegen_flags: <defaults>
</compile_context>

<pallas_src>
import jax
import jax.numpy as jnp
from jax.experimental import pallas as pl
from jax.experimental.pallas import tpu as pltpu

_LANES = 128           # fast (lane) axis width
_MAX_TILE_ROWS = 1024  # 1024 x 128 x 4B = 512 KiB per buffer -> well under VMEM


def _identity_copy_kernel(x_ref, o_ref):
    # Pure pass-through: copy the current tile.
    o_ref[...] = x_ref[...]


def pallas_identity(x):
    """Identity.forward(x): returns x unchanged (shape & dtype preserved)."""
    orig_shape = x.shape
    orig_dtype = x.dtype

    flat = x.reshape(-1)
    n = flat.shape[0]

    # Lay the data out as (rows, 128) so every store is a full, unmasked
    # 128-lane vector store.  Round rows up to a multiple of 8 (sublane tile)
    # and to a multiple of the row-tile so the grid divides evenly.
    rows = -(-n // _LANES)
    rows = -(-rows // 8) * 8
    tile_rows = min(_MAX_TILE_ROWS, rows)
    rows = -(-rows // tile_rows) * tile_rows
    padded = rows * _LANES

    if padded != n:
        flat = jnp.pad(flat, (0, padded - n))
    x2d = flat.reshape(rows, _LANES)

    grid = (rows // tile_rows,)

    out2d = pl.pallas_call(
        _identity_copy_kernel,
        out_shape=jax.ShapeDtypeStruct((rows, _LANES), orig_dtype),
        grid_spec=pltpu.PrefetchScalarGridSpec(
            num_scalar_prefetch=0,
            grid=grid,
            in_specs=[pl.BlockSpec((tile_rows, _LANES), lambda i: (i, 0))],
            out_specs=pl.BlockSpec((tile_rows, _LANES), lambda i: (i, 0)),
        ),
        # Output aliases the (padded, reshaped) input buffer: no extra HBM.
        input_output_aliases={0: 0},
        compiler_params=pltpu.CompilerParams(
            dimension_semantics=("parallel",),
        ),
    )(x2d)

    return out2d.reshape(-1)[:n].reshape(orig_shape)


# ----------------------------------- main -----------------------------------

if __name__ == "__main__":
    # Small shapes consistent with the module: batch=2, channels=4, spatial=16.
    x = jax.random.normal(jax.random.PRNGKey(0), (2, 4, 16, 16), jnp.float32)

    fwd = jax.jit(pallas_identity)
    out = fwd(x)
    out = jax.block_until_ready(out)

    assert out.shape == x.shape, out.shape
    assert out.dtype == x.dtype, out.dtype
    assert bool(jnp.array_equal(out, x)), "Identity output must equal input"
    print("KERNEL_OK")
</pallas_src>

<mosaic_0001>
module attributes {stable_mosaic.version = 11 : i64} {
  func.func @_identity_copy_kernel(%arg0: i32, %arg1: memref<16x128xf32, #tpu.memory_space<vmem>>, %arg2: memref<16x128xf32, #tpu.memory_space<vmem>>) attributes {dimension_semantics = [#tpu.dimension_semantics<parallel>], iteration_bounds = array<i64: 1>, scalar_prefetch = 0 : i64, scratch_operands = 0 : i64, tpu.core_type = #tpu.core_type<tc>, window_params = [{transform_indices = @transform_0, window_bounds = array<i64: 16, 128>}, {transform_indices = @transform_1, window_bounds = array<i64: 16, 128>}]} {
    %c0 = arith.constant 0 : index
    %c0_0 = arith.constant 0 : index
    %0 = vector.load %arg1[%c0, %c0_0] : memref<16x128xf32, #tpu.memory_space<vmem>>, vector<16x128xf32>
    %c0_1 = arith.constant 0 : index
    %c0_2 = arith.constant 0 : index
    %1 = vector.load %arg2[%c0_1, %c0_2] : memref<16x128xf32, #tpu.memory_space<vmem>>, vector<16x128xf32>
    tpu.vector_store %arg2[%c0_1, %c0_2], %0 {strides = array<i32>} : memref<16x128xf32, #tpu.memory_space<vmem>>, vector<16x128xf32>,
    return
  }
  func.func @transform_0(%arg0: i32) -> (i32, i32) {
    %c0_i32 = arith.constant 0 : i32
    %c0_i32_0 = arith.constant 0 : i32
    return %arg0, %c0_i32 : i32, i32
  }
  func.func @transform_1(%arg0: i32) -> (i32, i32) {
    %c0_i32 = arith.constant 0 : i32
    %c0_i32_0 = arith.constant 0 : i32
    return %arg0, %c0_i32 : i32, i32
  }
}

</mosaic_0001>

<llo_original>
// kernel: pallas_identity.1
$region0: #{pallas_identity.1}
  #allocation0 [shape = 'u32[]', space=smem, size = 0x4, offset = 0x4, fixed_abs, tag = 'smem constant byte address 0x4 - core index']
  #allocation1 [shape = 'u32[72,128]{1,0:T(1,128)}', space=vmem, size = 0x9000, scoped, tag = 'internal scratch']
  %s0 = inlined_call_operand.vmem [shape: f32[16,128], index: 0, kind: input, shape index: {}, may-alias: {0,1}]
  %s1 = inlined_call_operand.vmem [shape: f32[16,128], index: 1, kind: output, shape index: {}, may-alias: {0,1}]
  %s2 = sld [smem:[#allocation0]]
  $region14: #{pallas_identity.1} parent=0
    _
  %s4 = ssub.s32 1, %s2
  %s5 = scalar_select 0, %s4, %s2
  // Predicated region
  $region2: #{pallas_identity.1} parent=0 // pred_check
    _
  $region3: #{pallas_identity.1} parent=0 // pred_check_branch
    %7 = sbr.rel (0) target = $region5
  $region4: #{pallas_identity.1} parent=0 // pred_region
    _
  $region5: #{pallas_identity.1} parent=0 // pred_fallthru
    _
  %v8 = vld [vmem:[%s0] sm:$0xff]
  %v9 = vld [vmem:[%s0 + $0x8] sm:$0xff]
  %10 = vst [vmem:[%s1] sm:$0xff] %v8
  %11 = vst [vmem:[%s1 + $0x8] sm:$0xff] %v9
  // Predicated region
  $region6: #{pallas_identity.1} parent=0 // pred_check
    _
  $region7: #{pallas_identity.1} parent=0 // pred_check_branch
    %13 = sbr.rel (0) target = $region9
  $region8: #{pallas_identity.1} parent=0 // pred_region
    _
  $region9: #{pallas_identity.1} parent=0 // pred_fallthru
    _
  // Predicated region
  $region10: #{pallas_identity.1} parent=0 // pred_check
    _
  $region11: #{pallas_identity.1} parent=0 // pred_check_branch
    %15 = sbr.rel (0) target = $region13
  $region12: #{pallas_identity.1} parent=0 // pred_region
    _
  $region13: #{pallas_identity.1} parent=0 // pred_fallthru
    _

</llo_original>
